<compile_context>
chip_gen: v5e
topology: v5e:2x2
jax: 0.10.0
libtpu: 0.0.40
codegen_flags: <defaults>
</compile_context>

<pallas_src>
import jax
import jax.numpy as jnp
from jax.experimental import pallas as pl
from jax.experimental.pallas import tpu as pltpu


def _round_up(x, m):
    return ((x + m - 1) // m) * m


def cbs_kernel(p_ref, w_ref, b_ref, o_ref):
    # p_ref: (tm, Kp)  bf16 patch tile
    # w_ref: (Kp, Cp)  bf16 conv weight with BN scale folded into columns
    # b_ref: (1,  Cp)  f32 folded BN bias (beta - mean * scale)
    # o_ref: (tm, Cp)  f32 output tile (lane-dense, Cp % 128 == 0)
    acc = jnp.dot(p_ref[...], w_ref[...], preferred_element_type=jnp.float32)
    y = acc + b_ref[...]
    o_ref[...] = (y * jax.nn.sigmoid(y)).astype(o_ref.dtype)  # SiLU


def _im2col(x, ksize, stride, padding):
    """x: [N, Cin, H, W] f32 -> patches [N*Ho*Wo, Cin*k*k], k-index ordered (ci, kh, kw)."""
    n, cin, h, w = x.shape
    ho = (h + 2 * padding - ksize) // stride + 1
    wo = (w + 2 * padding - ksize) // stride + 1
    xp = jnp.pad(x, ((0, 0), (0, 0), (padding, padding), (padding, padding)))
    taps = []
    for kh in range(ksize):
        for kw in range(ksize):
            taps.append(xp[:, :, kh:kh + stride * ho:stride, kw:kw + stride * wo:stride])
    p = jnp.stack(taps, axis=0).reshape(ksize, ksize, n, cin, ho, wo)
    # -> [N, Ho, Wo, Cin, kh, kw] -> [M, Cin*k*k]  (matches PyTorch OIHW flattening)
    p = jnp.transpose(p, (2, 4, 5, 3, 0, 1)).reshape(n * ho * wo, cin * ksize * ksize)
    return p, ho, wo


def cbs_forward(x, conv_w, gamma, beta, run_mean, run_var, *,
                stride=1, padding=None, eps=1e-5, tm=256):
    """CBS forward. x: [N, Cin, H, W]; conv_w: [Cout, Cin, k, k]. Returns NCHW."""
    # TODO(synk): groups != 1 and dilation != 1 variants of the conv are not implemented.
    n, cin, h, w = x.shape
    cout, cin_w, ksize, _ = conv_w.shape
    assert cin_w == cin
    if padding is None:
        padding = ksize // 2

    patches, ho, wo = _im2col(x.astype(jnp.float32), ksize, stride, padding)
    m, k = patches.shape

    # Fold BatchNorm (eval / running-stats) into the GEMM.
    scale = gamma / jnp.sqrt(run_var + eps)                                  # [Cout]
    bias = beta - run_mean * scale                                           # [Cout]
    w_mat = conv_w.reshape(cout, k).T.astype(jnp.float32) * scale[None, :]   # [K, Cout]

    # TPU-friendly padding: lane-dense output, MXU-aligned contraction, tileable M.
    kp = _round_up(k, 128)
    cp = _round_up(cout, 128)
    mp = _round_up(m, tm)

    patches_p = jnp.pad(patches, ((0, mp - m), (0, kp - k))).astype(jnp.bfloat16)
    w_p = jnp.pad(w_mat, ((0, kp - k), (0, cp - cout))).astype(jnp.bfloat16)
    bias_p = jnp.pad(bias.reshape(1, cout), ((0, 0), (0, cp - cout))).astype(jnp.float32)

    out_flat = pl.pallas_call(
        cbs_kernel,
        out_shape=jax.ShapeDtypeStruct((mp, cp), jnp.float32),
        grid_spec=pltpu.PrefetchScalarGridSpec(
            num_scalar_prefetch=0,
            grid=(mp // tm,),
            in_specs=[
                pl.BlockSpec((tm, kp), lambda i: (i, 0)),
                pl.BlockSpec((kp, cp), lambda i: (0, 0)),
                pl.BlockSpec((1, cp), lambda i: (0, 0)),
            ],
            out_specs=pl.BlockSpec((tm, cp), lambda i: (i, 0)),
        ),
        compiler_params=pltpu.CompilerParams(
            dimension_semantics=("parallel",),
            vmem_limit_bytes=32 * 1024 * 1024,
            allow_input_fusion=[True, False, False],
        ),
    )(patches_p, w_p, bias_p)

    # Slice off padding, reshape [M, Cout] -> [N, Ho, Wo, Cout] -> NCHW (PyTorch layout).
    out = out_flat[:m, :cout].reshape(n, ho, wo, cout)
    return jnp.transpose(out, (0, 3, 1, 2))


def reference_forward(x, conv_w, gamma, beta, run_mean, run_var, *,
                      stride=1, padding=1, eps=1e-5):
    y = jax.lax.conv_general_dilated(
        x.astype(jnp.float32), conv_w.astype(jnp.float32),
        window_strides=(stride, stride),
        padding=((padding, padding), (padding, padding)),
        dimension_numbers=("NCHW", "OIHW", "NCHW"))
    scale = (gamma / jnp.sqrt(run_var + eps))[None, :, None, None]
    bias = (beta - run_mean * gamma / jnp.sqrt(run_var + eps))[None, :, None, None]
    y = y * scale + bias
    return y * jax.nn.sigmoid(y)


if __name__ == "__main__":
    key = jax.random.PRNGKey(0)
    k_x, k_w, k_g, k_b, k_m, k_v = jax.random.split(key, 6)

    # CBS(in_channels=4, out_channels=8, kernel_size=3) defaults: stride=1, padding=k//2=1.
    N, Cin, H, W = 2, 4, 16, 16
    Cout, K = 8, 3

    x = jax.random.normal(k_x, (N, Cin, H, W), dtype=jnp.float32)
    conv_w = jax.random.normal(k_w, (Cout, Cin, K, K), dtype=jnp.float32) * 0.1
    # BatchNorm2d params, eval mode with deterministic running stats.
    # TODO(synk): PyTorch training-mode BatchNorm (batch statistics) is not implemented;
    # eval-mode running-stats semantics are folded into the GEMM here.
    gamma = 1.0 + 0.1 * jax.random.normal(k_g, (Cout,), dtype=jnp.float32)
    beta = 0.1 * jax.random.normal(k_b, (Cout,), dtype=jnp.float32)
    run_mean = 0.1 * jax.random.normal(k_m, (Cout,), dtype=jnp.float32)
    run_var = 1.0 + 0.1 * jax.random.uniform(k_v, (Cout,), dtype=jnp.float32)

    out = cbs_forward(x, conv_w, gamma, beta, run_mean, run_var, stride=1, padding=None)
    out = jax.block_until_ready(out)

    ref = reference_forward(x, conv_w, gamma, beta, run_mean, run_var, stride=1, padding=1)
    assert out.shape == (N, Cout, H, W), out.shape
    # bf16 MXU operands vs f32 reference -> relaxed tolerance.
    assert jnp.allclose(out, ref, atol=5e-2, rtol=5e-2), float(jnp.max(jnp.abs(out - ref)))

    print("KERNEL_OK")
</pallas_src>

<mosaic_0001>
module attributes {stable_mosaic.version = 11 : i64} {
  func.func @cbs_kernel(%arg0: i32, %arg1: memref<256x128xbf16, #tpu.memory_space<vmem>>, %arg2: memref<128x128xbf16, #tpu.memory_space<vmem>>, %arg3: memref<1x128xf32, #tpu.memory_space<vmem>>, %arg4: memref<256x128xf32, #tpu.memory_space<vmem>>) attributes {dimension_semantics = [#tpu.dimension_semantics<parallel>], iteration_bounds = array<i64: 2>, scalar_prefetch = 0 : i64, scratch_operands = 0 : i64, tpu.core_type = #tpu.core_type<tc>, window_params = [{transform_indices = @transform_0, window_bounds = array<i64: 256, 128>}, {pipeline_mode = #tpu.pipeline_mode<synchronous>, transform_indices = @transform_1, window_bounds = array<i64: 128, 128>}, {pipeline_mode = #tpu.pipeline_mode<synchronous>, transform_indices = @transform_2, window_bounds = array<i64: 1, 128>}, {transform_indices = @transform_3, window_bounds = array<i64: 256, 128>}]} {
    %c0 = arith.constant 0 : index
    %c0_0 = arith.constant 0 : index
    %0 = vector.load %arg1[%c0, %c0_0] : memref<256x128xbf16, #tpu.memory_space<vmem>>, vector<256x128xbf16>
    %c0_1 = arith.constant 0 : index
    %c0_2 = arith.constant 0 : index
    %1 = vector.load %arg2[%c0_1, %c0_2] : memref<128x128xbf16, #tpu.memory_space<vmem>>, vector<128x128xbf16>
    %cst = arith.constant dense<0.000000e+00> : vector<256x128xf32>
    %2 = tpu.matmul %0, %1, %cst {dimension_numbers = #tpu.dot_dimension_numbers<[1], [0], [0], [1], [0, 0, 1, 1], [], []>} : vector<256x128xbf16>, vector<128x128xbf16>, vector<256x128xf32> -> vector<256x128xf32>
    %c0_3 = arith.constant 0 : index
    %c0_4 = arith.constant 0 : index
    %3 = vector.load %arg3[%c0_3, %c0_4] : memref<1x128xf32, #tpu.memory_space<vmem>>, vector<1x128xf32>
    %4 = vector.broadcast %3 : vector<1x128xf32> to vector<256x128xf32>
    %5 = arith.addf %2, %4 : vector<256x128xf32>
    %6 = arith.negf %5 : vector<256x128xf32>
    %7 = math.exp %6 : vector<256x128xf32>
    %cst_5 = arith.constant 1.000000e+00 : f32
    %8 = vector.broadcast %cst_5 : f32 to vector<256x128xf32>
    %9 = arith.addf %8, %7 : vector<256x128xf32>
    %10 = arith.divf %8, %9 : vector<256x128xf32>
    %11 = arith.mulf %5, %10 : vector<256x128xf32>
    %c0_6 = arith.constant 0 : index
    %c0_7 = arith.constant 0 : index
    %12 = vector.load %arg4[%c0_6, %c0_7] : memref<256x128xf32, #tpu.memory_space<vmem>>, vector<256x128xf32>
    tpu.vector_store %arg4[%c0_6, %c0_7], %11 {strides = array<i32>} : memref<256x128xf32, #tpu.memory_space<vmem>>, vector<256x128xf32>,
    return
  }
  func.func @transform_0(%arg0: i32) -> (i32, i32) {
    %c0_i32 = arith.constant 0 : i32
    %c0_i32_0 = arith.constant 0 : i32
    return %arg0, %c0_i32 : i32, i32
  }
  func.func @transform_1(%arg0: i32) -> (i32, i32) {
    %c0_i32 = arith.constant 0 : i32
    %c0_i32_0 = arith.constant 0 : i32
    %c0_i32_1 = arith.constant 0 : i32
    return %c0_i32, %c0_i32_0 : i32, i32
  }
  func.func @transform_2(%arg0: i32) -> (i32, i32) {
    %c0_i32 = arith.constant 0 : i32
    %c0_i32_0 = arith.constant 0 : i32
    %c0_i32_1 = arith.constant 0 : i32
    return %c0_i32, %c0_i32_0 : i32, i32
  }
  func.func @transform_3(%arg0: i32) -> (i32, i32) {
    %c0_i32 = arith.constant 0 : i32
    %c0_i32_0 = arith.constant 0 : i32
    return %arg0, %c0_i32 : i32, i32
  }
}

</mosaic_0001>

<llo_original>
// kernel: tpu_custom_call.1
$region0: #{tpu_custom_call.1}
  #allocation0 [shape = 'u32[]', space=smem, size = 0x4, offset = 0x4, fixed_abs, tag = 'smem constant byte address 0x4 - core index']
  #allocation1 [shape = 'u32[72,128]{1,0:T(1,128)}', space=vmem, size = 0x9000, scoped, tag = 'internal scratch']
  %s0 = inlined_call_operand.hbm [shape: bf16[512,128], index: 0, kind: input, shape index: {}]
  %s1 = inlined_call_operand.hbm [shape: bf16[128,128], index: 1, kind: input, shape index: {}]
  %s2 = inlined_call_operand.vmem [shape: f32[1,128], index: 2, kind: input, shape index: {}]
  %s3 = inlined_call_operand.hbm [shape: f32[512,128], index: 3, kind: output, shape index: {}]
  %s4 = sld [smem:[#allocation0]]
  $region53: #{tpu_custom_call.1} parent=0
    _
  %s6 = ssub.s32 1, %s4
  %s7 = scalar_select 0, %s6, %s4
  $region1: #{tpu_custom_call.1} parent=0
    #allocation2 [shape = 'u8[131072]{0}', space=vmem, size = 0x20000, scoped, tag = 'input window, operand 0']
    #allocation3 [shape = 's32[2]{0}', space=sflag, size = 0x8, scoped, tag = 'scoped memory for tpu_custom_call.1']
    #allocation4 [shape = 's32[2]{0}', space=sflag, size = 0x8, scoped, tag = 'scoped memory for tpu_custom_call.1']
    #allocation5 [shape = 'u8[32768]{0}', space=vmem, size = 0x8000, scoped, tag = 'input window, operand 1, single buffered']
    #allocation6 [shape = 's32[1]{0}', space=sflag, size = 0x4, scoped, tag = 'scoped memory for tpu_custom_call.1']
    #allocation7 [shape = 'u8[262144]{0}', space=vmem, size = 0x40000, scoped, tag = 'output window, operand 0']
    %8 = vsyncpa [#allocation3], 0
    %s9 = scalar_lea.sflag [#allocation3], 1
    %10 = vsyncpa %s9, 0
    %11 = vsyncpa [#allocation6], 0
    %12 = vsyncpa [#allocation4], 0
    %s13 = scalar_lea.sflag [#allocation4], 1
    %14 = vsyncpa %s13, 0
    loop: start=0, step=1, limit=4
    $region2: #{tpu_custom_call.1} parent=1 // loop_pre_header
      _
    $region3: #{tpu_custom_call.1} parent=1 // loop_header
      %s16 = sphi 0, %s20
      %p17 = scmp.ge.s32.totalorder %s16, 4
      %s26 = sphi 0, %s28
      %s29 = sphi 0, %s26
      %s30 = sphi 0, %s29
      %s46 = sphi 0, %s30
      %s50 = sphi 0, %s50
      %s52 = sphi 0, %s50
      %s53 = sphi 0, %s52
      %s67 = sphi 0, %s53
      %s71 = sphi 0, %s71
      %s73 = sphi 0, %s71
      %s74 = sphi 0, %s73
      %s88 = sphi 0, %s74
      %s94 = sphi 0, %s96
      %s97 = sphi 0, %s94
      %s98 = sphi 0, %s97
      %s114 = sphi 0, %s98
    $region4: #{tpu_custom_call.1} parent=1 // loop_header_branch
      %19 = sbr.rel (%p17) target = $region8
    $region5: #{tpu_custom_call.1} parent=1 // loop_body
      %s21 = ssub.s32 %s16, 1
      %s22 = ssub.s32 %s16, 2
      %s23 = sadd.s32 %s16, 1
      %s24 = ssub.s32 %s16, %s23
      %p25 = scmp.eq.s32.totalorder %s24, 0
      %s27 = sadd.s32 %s26, 1
      %s28 = scalar_select %p25, %s26, %s27
      %p31 = pneg %p25
      %p32 = scmp.eq.s32.totalorder %s16, 1
      %p33 = por %p31, %p32
      %p34 = scmp.ne.s32.totalorder %s26, %s29
      %p35 = scmp.eq.s32.totalorder %s16, 0
      %p36 = por %p34, %p35
      %p37 = scmp.ne.s32.totalorder %s26, %s29
      %p38 = scmp.eq.s32.totalorder %s21, 1
      %p39 = por %p37, %p38
      %p40 = scmp.ne.s32.totalorder %s29, %s30
      %p41 = scmp.eq.s32.totalorder %s21, 0
      %p42 = por %p40, %p41
      %p43 = scmp.ne.s32.totalorder %s29, %s30
      %p44 = scmp.eq.s32.totalorder %s22, 1
      %p45 = por %p43, %p44
      %p47 = scmp.ne.s32.totalorder %s30, %s46
      %p48 = scmp.eq.s32.totalorder %s22, 0
      %p49 = por %p47, %p48
      %s51 = sadd.s32 %s50, 1
      %p54 = scmp.eq.s32.totalorder %s16, 1
      %p55 = scmp.ne.s32.totalorder %s50, %s52
      %p56 = scmp.eq.s32.totalorder %s16, 0
      %p57 = por %p55, %p56
      %p58 = scmp.ne.s32.totalorder %s50, %s52
      %p59 = scmp.eq.s32.totalorder %s21, 1
      %p60 = por %p58, %p59
      %p61 = scmp.ne.s32.totalorder %s52, %s53
      %p62 = scmp.eq.s32.totalorder %s21, 0
      %p63 = por %p61, %p62
      %p64 = scmp.ne.s32.totalorder %s52, %s53
      %p65 = scmp.eq.s32.totalorder %s22, 1
      %p66 = por %p64, %p65
      %p68 = scmp.ne.s32.totalorder %s53, %s67
      %p69 = scmp.eq.s32.totalorder %s22, 0
      %p70 = por %p68, %p69
      %s72 = sadd.s32 %s71, 1
      %p75 = scmp.eq.s32.totalorder %s16, 1
      %p76 = scmp.ne.s32.totalorder %s71, %s73
      %p77 = scmp.eq.s32.totalorder %s16, 0
      %p78 = por %p76, %p77
      %p79 = scmp.ne.s32.totalorder %s71, %s73
      %p80 = scmp.eq.s32.totalorder %s21, 1
      %p81 = por %p79, %p80
      %p82 = scmp.ne.s32.totalorder %s73, %s74
      %p83 = scmp.eq.s32.totalorder %s21, 0
      %p84 = por %p82, %p83
      %p85 = scmp.ne.s32.totalorder %s73, %s74
      %p86 = scmp.eq.s32.totalorder %s22, 1
      %p87 = por %p85, %p86
      %p89 = scmp.ne.s32.totalorder %s74, %s88
      %p90 = scmp.eq.s32.totalorder %s22, 0
      %p91 = por %p89, %p90
      %s92 = ssub.s32 %s16, %s23
      %p93 = scmp.eq.s32.totalorder %s92, 0
      %s95 = sadd.s32 %s94, 1
      %s96 = scalar_select %p93, %s94, %s95
      %p99 = pneg %p93
      %p100 = scmp.eq.s32.totalorder %s16, 1
      %p101 = por %p99, %p100
      %p102 = scmp.ne.s32.totalorder %s94, %s97
      %p103 = scmp.eq.s32.totalorder %s16, 0
      %p104 = por %p102, %p103
      %p105 = scmp.ne.s32.totalorder %s94, %s97
      %p106 = scmp.eq.s32.totalorder %s21, 1
      %p107 = por %p105, %p106
      %p108 = scmp.ne.s32.totalorder %s97, %s98
      %p109 = scmp.eq.s32.totalorder %s21, 0
      %p110 = por %p108, %p109
      %p111 = scmp.ne.s32.totalorder %s97, %s98
      %p112 = scmp.eq.s32.totalorder %s22, 1
      %p113 = por %p111, %p112
      %p115 = scmp.ne.s32.totalorder %s98, %s114
      %p116 = scmp.eq.s32.totalorder %s22, 0
      %p117 = por %p115, %p116
      %p118 = scmp.le.s32.totalorder 1, %s16
      %p119 = scmp.lt.s32.totalorder %s16, 3
      %p120 = pnand %p118, %p119
      %p121 = pneg %p120
      // Predicated region
      $region9: #{tpu_custom_call.1} parent=5 // pred_check
        _
      $region10: #{tpu_custom_call.1} parent=5 // pred_check_branch
        %123 = sbr.rel (%p120) target = $region12
      $region11: #{tpu_custom_call.1} parent=5 // pred_region
        %s124 = ssub.s32 %s16, 1
        // Predicated region
        $region13: #{tpu_custom_call.1} parent=11 // pred_check
          %p125 = pneg %p63
        $region14: #{tpu_custom_call.1} parent=11 // pred_check_branch
          %127 = sbr.rel (%p125) target = $region16
        $region15: #{tpu_custom_call.1} parent=11 // pred_region
          %129 = vsyncadd [#allocation6], 0
          %s130 = sshll.u32 %s1, 4
          %s131 = int_to_ptr.hbm [resolvable:$true] %s130
          %s132 = sshll.u32 [#allocation5], 4
          %s133 = int_to_ptr.vmem [resolvable:$true] %s132
          %138 = dma.hbm_to_vmem [thread:$0]  %s131, 1024, %s133, [#allocation6], 64, 64, 4
        $region16: #{tpu_custom_call.1} parent=11 // pred_fallthru
          _
        // Predicated region
        $region17: #{tpu_custom_call.1} parent=11 // pred_check
          %p139 = pneg %p84
        $region18: #{tpu_custom_call.1} parent=11 // pred_check_branch
          %141 = sbr.rel (%p139) target = $region20
        $region19: #{tpu_custom_call.1} parent=11 // pred_region
          _
        $region20: #{tpu_custom_call.1} parent=11 // pred_fallthru
          _
      $region12: #{tpu_custom_call.1} parent=5 // pred_fallthru
        _
      %p142 = scmp.lt.s32.totalorder %s16, 2
      // Predicated region
      $region21: #{tpu_custom_call.1} parent=5 // pred_check
        %p143 = pneg %p142
      $region22: #{tpu_custom_call.1} parent=5 // pred_check_branch
        %145 = sbr.rel (%p143) target = $region24
      $region23: #{tpu_custom_call.1} parent=5 // pred_region
        // Predicated region
        $region25: #{tpu_custom_call.1} parent=23 // pred_check
          %p146 = pneg %p36
        $region26: #{tpu_custom_call.1} parent=23 // pred_check_branch
          %148 = sbr.rel (%p146) target = $region28
        $region27: #{tpu_custom_call.1} parent=23 // pred_region
          %s149 = sand.u32 %s26, 1
          %s150 = scalar_lea.sflag [#allocation3], %s149
          %s151 = sand.u32 %s26, 1
          %s152 = smul.addr %s151, 128
          %s153 = scalar_lea.vmem [#allocation2], %s152
          %s154 = smul.u32 32, %s16
          %156 = vsyncadd %s150, 0
          %s157 = smul.addr %s154, 4
          %s158 = scalar_lea.hbm %s0, %s157
          %s159 = sshll.u32 %s158, 4
          %s160 = int_to_ptr.hbm [resolvable:$true] %s159
          %s161 = sshll.u32 %s153, 4
          %s162 = int_to_ptr.vmem [resolvable:$true] %s161
          %167 = dma.hbm_to_vmem [thread:$0]  %s160, 2048, %s162, %s150, 64, 64, 4
        $region28: #{tpu_custom_call.1} parent=23 // pred_fallthru
          _
      $region24: #{tpu_custom_call.1} parent=5 // pred_fallthru
        _
      %p168 = scmp.le.s32.totalorder 1, %s16
      %p169 = scmp.lt.s32.totalorder %s16, 3
      %p170 = pnand %p168, %p169
      %p171 = pneg %p170
      // Predicated region
      $region29: #{tpu_custom_call.1} parent=5 // pred_check
        _
      $region30: #{tpu_custom_call.1} parent=5 // pred_check_branch
        %173 = sbr.rel (%p170) target = $region32
      $region31: #{tpu_custom_call.1} parent=5 // pred_region
        %s174 = ssub.s32 %s16, 1
        %s175 = sand.u32 %s29, 1
        %s176 = scalar_lea.sflag [#allocation3], %s175
        %s177 = sand.u32 %s29, 1
        %s178 = smul.addr %s177, 128
        %s179 = scalar_lea.vmem [#allocation2], %s178
        // Predicated region
        $region33: #{tpu_custom_call.1} parent=31 // pred_check
          %p180 = pneg %p42
        $region34: #{tpu_custom_call.1} parent=31 // pred_check_branch
          %182 = sbr.rel (%p180) target = $region36
        $region35: #{tpu_custom_call.1} parent=31 // pred_region
          %184 = dma.done %s176, 2048
        $region36: #{tpu_custom_call.1} parent=31 // pred_fallthru
          _
        // Predicated region
        $region37: #{tpu_custom_call.1} parent=31 // pred_check
          %p185 = pneg %p63
        $region38: #{tpu_custom_call.1} parent=31 // pred_check_branch
          %187 = sbr.rel (%p185) target = $region40
        $region39: #{tpu_custom_call.1} parent=31 // pred_region
          %189 = dma.done [#allocation6], 1024
        $region40: #{tpu_custom_call.1} parent=31 // pred_fallthru
          _
        %s190 = sand.u32 %s29, 1
        %s191 = scalar_lea.sflag [#allocation3], %s190
        %s192 = sand.u32 %s29, 1
        %s193 = smul.addr %s192, 128
        %s194 = scalar_lea.vmem [#allocation2], %s193
        %p195 = pneg %p42
        %p196 = pneg %p39
        %p197 = pneg %p63
        %p198 = pneg %p60
        %p199 = pneg %p84
        %p200 = pneg %p81
        %p201 = pneg %p110
        %p202 = pneg %p107
        %s203 = sand.u32 %s97, 1
        %s204 = scalar_lea.sflag [#allocation4], %s203
        %s205 = sand.u32 %s97, 1
        %s206 = smul.addr %s205, 256
        %s207 = scalar_lea.vmem [#allocation7], %s206
        %s208 = smul.u32 32, %s21
        %s209 = smul.u32 32, %s21
        %v210 = vld [vmem:[%s179] sm:$0xf]
        %v211 = vld [vmem:[%s179 + $0x4] sm:$0xf]
        %v212 = vld [vmem:[%s179 + $0x8] sm:$0xf]
        %v213 = vld [vmem:[%s179 + $0xc] sm:$0xf]
        %v214 = vld [vmem:[%s179 + $0x10] sm:$0xf]
        %v215 = vld [vmem:[%s179 + $0x14] sm:$0xf]
        %v216 = vld [vmem:[%s179 + $0x18] sm:$0xf]
        %v217 = vld [vmem:[%s179 + $0x1c] sm:$0xf]
        %v218 = vld [vmem:[%s179 + $0x20] sm:$0xf]
        %v219 = vld [vmem:[%s179 + $0x24] sm:$0xf]
        %v220 = vld [vmem:[%s179 + $0x28] sm:$0xf]
        %v221 = vld [vmem:[%s179 + $0x2c] sm:$0xf]
        %v222 = vld [vmem:[%s179 + $0x30] sm:$0xf]
        %v223 = vld [vmem:[%s179 + $0x34] sm:$0xf]
        %v224 = vld [vmem:[%s179 + $0x38] sm:$0xf]
        %v225 = vld [vmem:[%s179 + $0x3c] sm:$0xf]
        %v226 = vld [vmem:[%s179 + $0x40] sm:$0xf]
        %v227 = vld [vmem:[%s179 + $0x44] sm:$0xf]
        %v228 = vld [vmem:[%s179 + $0x48] sm:$0xf]
        %v229 = vld [vmem:[%s179 + $0x4c] sm:$0xf]
        %v230 = vld [vmem:[%s179 + $0x50] sm:$0xf]
        %v231 = vld [vmem:[%s179 + $0x54] sm:$0xf]
        %v232 = vld [vmem:[%s179 + $0x58] sm:$0xf]
        %v233 = vld [vmem:[%s179 + $0x5c] sm:$0xf]
        %v234 = vld [vmem:[%s179 + $0x60] sm:$0xf]
        %v235 = vld [vmem:[%s179 + $0x64] sm:$0xf]
        %v236 = vld [vmem:[%s179 + $0x68] sm:$0xf]
        %v237 = vld [vmem:[%s179 + $0x6c] sm:$0xf]
        %v238 = vld [vmem:[%s179 + $0x70] sm:$0xf]
        %v239 = vld [vmem:[%s179 + $0x74] sm:$0xf]
        %v240 = vld [vmem:[%s179 + $0x78] sm:$0xf]
        %v241 = vld [vmem:[%s179 + $0x7c] sm:$0xf]
        %v242 = vld [vmem:[#allocation5] sm:$0xf]
        %v243 = vld [vmem:[#allocation5 + $0x4] sm:$0xf]
        %v244 = vld [vmem:[#allocation5 + $0x8] sm:$0xf]
        %v245 = vld [vmem:[#allocation5 + $0xc] sm:$0xf]
        %v246 = vld [vmem:[#allocation5 + $0x10] sm:$0xf]
        %v247 = vld [vmem:[#allocation5 + $0x14] sm:$0xf]
        %v248 = vld [vmem:[#allocation5 + $0x18] sm:$0xf]
        %v249 = vld [vmem:[#allocation5 + $0x1c] sm:$0xf]
        %v250 = vld [vmem:[#allocation5 + $0x20] sm:$0xf]
        %v251 = vld [vmem:[#allocation5 + $0x24] sm:$0xf]
        %v252 = vld [vmem:[#allocation5 + $0x28] sm:$0xf]
        %v253 = vld [vmem:[#allocation5 + $0x2c] sm:$0xf]
        %v254 = vld [vmem:[#allocation5 + $0x30] sm:$0xf]
        %v255 = vld [vmem:[#allocation5 + $0x34] sm:$0xf]
        %v256 = vld [vmem:[#allocation5 + $0x38] sm:$0xf]
        %v257 = vld [vmem:[#allocation5 + $0x3c] sm:$0xf]
        %v258 = vld [vmem:[%s2] sm:$0x1]
        %v260 = vperm.slane %v258, 0
        %v294 = vunpack.c.l.b16 %v210
        %v295 = vunpack.c.l.b16 %v211
        %v296 = vunpack.c.l.b16 %v212
        %v297 = vunpack.c.l.b16 %v213
        %v298 = vunpack.c.l.b16 %v214
        %v299 = vunpack.c.l.b16 %v215
        %v300 = vunpack.c.l.b16 %v216
        %v301 = vunpack.c.l.b16 %v217
        %v302 = vunpack.c.l.b16 %v218
        %v303 = vunpack.c.l.b16 %v219
        %v304 = vunpack.c.l.b16 %v220
        %v305 = vunpack.c.l.b16 %v221
        %v306 = vunpack.c.l.b16 %v222
        %v307 = vunpack.c.l.b16 %v223
        %v308 = vunpack.c.l.b16 %v224
        %v309 = vunpack.c.l.b16 %v225
        %v310 = vunpack.c.l.b16 %v226
        %v311 = vunpack.c.l.b16 %v227
        %v312 = vunpack.c.l.b16 %v228
        %v313 = vunpack.c.l.b16 %v229
        %v314 = vunpack.c.l.b16 %v230
        %v315 = vunpack.c.l.b16 %v231
        %v316 = vunpack.c.l.b16 %v232
        %v317 = vunpack.c.l.b16 %v233
        %v318 = vunpack.c.l.b16 %v234
        %v319 = vunpack.c.l.b16 %v235
        %v320 = vunpack.c.l.b16 %v236
        %v321 = vunpack.c.l.b16 %v237
        %v322 = vunpack.c.l.b16 %v238
        %v323 = vunpack.c.l.b16 %v239
        %v324 = vunpack.c.l.b16 %v240
        %v325 = vunpack.c.l.b16 %v241
        %v326 = vpack.c.b16 %v295, %v294
        %v327 = vpack.c.b16 %v297, %v296
        %v328 = vpack.c.b16 %v299, %v298
        %v329 = vpack.c.b16 %v301, %v300
        %v330 = vpack.c.b16 %v303, %v302
        %v331 = vpack.c.b16 %v305, %v304
        %v332 = vpack.c.b16 %v307, %v306
        %v333 = vpack.c.b16 %v309, %v308
        %v334 = vpack.c.b16 %v311, %v310
        %v335 = vpack.c.b16 %v313, %v312
        %v336 = vpack.c.b16 %v315, %v314
        %v337 = vpack.c.b16 %v317, %v316
        %v338 = vpack.c.b16 %v319, %v318
        %v339 = vpack.c.b16 %v321, %v320
        %v340 = vpack.c.b16 %v323, %v322
        %v341 = vpack.c.b16 %v325, %v324
        %v374 = vunpack.c.l.b16 %v242
        %v375 = vunpack.c.l.b16 %v243
        %v376 = vunpack.c.l.b16 %v244
        %v377 = vunpack.c.l.b16 %v245
        %v378 = vunpack.c.l.b16 %v246
        %v379 = vunpack.c.l.b16 %v247
        %v380 = vunpack.c.l.b16 %v248
        %v381 = vunpack.c.l.b16 %v249
        %v382 = vunpack.c.l.b16 %v250
        %v383 = vunpack.c.l.b16 %v251
        %v384 = vunpack.c.l.b16 %v252
        %v385 = vunpack.c.l.b16 %v253
        %v386 = vunpack.c.l.b16 %v254
        %v387 = vunpack.c.l.b16 %v255
        %v388 = vunpack.c.l.b16 %v256
        %v389 = vunpack.c.l.b16 %v257
        %v390 = vpack.c.b16 %v375, %v374
        %v391 = vpack.c.b16 %v377, %v376
        %v392 = vpack.c.b16 %v379, %v378
        %v393 = vpack.c.b16 %v381, %v380
        %v394 = vpack.c.b16 %v383, %v382
        %v395 = vpack.c.b16 %v385, %v384
        %v396 = vpack.c.b16 %v387, %v386
        %v397 = vpack.c.b16 %v389, %v388
        %406 = vmatpush.bf16.msra.mxu0 %v397
        %407 = vmatpush.bf16.msra.mxu0 %v396
        %408 = vmatpush.bf16.msra.mxu0 %v395
        %409 = vmatpush.bf16.msra.mxu0 %v394
        %410 = vmatpush.bf16.msra.mxu0 %v393
        %411 = vmatpush.bf16.msra.mxu0 %v392
        %412 = vmatpush.bf16.msra.mxu0 %v391
        %413 = vmatpush.bf16.msra.mxu0 %v390
        %414 = vmatmul.bf16.gmra.mxu0 %v326
        %v415 = vpop.f32.mrf.mxu0
        %v416 = vadd.f32 %v260, %v415
        %v417 = vpop.f32.mrf.mxu0
        %v418 = vadd.f32 %v260, %v417
        %419 = vmatmul.bf16.gmra.mxu0 %v327
        %v420 = vpop.f32.mrf.mxu0
        %v421 = vadd.f32 %v260, %v420
        %v422 = vpop.f32.mrf.mxu0
        %v423 = vadd.f32 %v260, %v422
        %424 = vmatmul.bf16.gmra.mxu0 %v328
        %v425 = vpop.f32.mrf.mxu0
        %v426 = vadd.f32 %v260, %v425
        %v427 = vpop.f32.mrf.mxu0
        %v428 = vadd.f32 %v260, %v427
        %429 = vmatmul.bf16.gmra.mxu0 %v329
        %v430 = vpop.f32.mrf.mxu0
        %v431 = vadd.f32 %v260, %v430
        %v432 = vpop.f32.mrf.mxu0
        %v433 = vadd.f32 %v260, %v432
        %434 = vmatmul.bf16.gmra.mxu0 %v330
        %v435 = vpop.f32.mrf.mxu0
        %v436 = vadd.f32 %v260, %v435
        %v437 = vpop.f32.mrf.mxu0
        %v438 = vadd.f32 %v260, %v437
        %439 = vmatmul.bf16.gmra.mxu0 %v331
        %v440 = vpop.f32.mrf.mxu0
        %v441 = vadd.f32 %v260, %v440
        %v442 = vpop.f32.mrf.mxu0
        %v443 = vadd.f32 %v260, %v442
        %444 = vmatmul.bf16.gmra.mxu0 %v332
        %v445 = vpop.f32.mrf.mxu0
        %v446 = vadd.f32 %v260, %v445
        %v447 = vpop.f32.mrf.mxu0
        %v448 = vadd.f32 %v260, %v447
        %449 = vmatmul.bf16.gmra.mxu0 %v333
        %v450 = vpop.f32.mrf.mxu0
        %v451 = vadd.f32 %v260, %v450
        %v452 = vpop.f32.mrf.mxu0
        %v453 = vadd.f32 %v260, %v452
        %454 = vmatmul.bf16.gmra.mxu0 %v334
        %v455 = vpop.f32.mrf.mxu0
        %v456 = vadd.f32 %v260, %v455
        %v457 = vpop.f32.mrf.mxu0
        %v458 = vadd.f32 %v260, %v457
        %459 = vmatmul.bf16.gmra.mxu0 %v335
        %v460 = vpop.f32.mrf.mxu0
        %v461 = vadd.f32 %v260, %v460
        %v462 = vpop.f32.mrf.mxu0
        %v463 = vadd.f32 %v260, %v462
        %464 = vmatmul.bf16.gmra.mxu0 %v336
        %v465 = vpop.f32.mrf.mxu0
        %v466 = vadd.f32 %v260, %v465
        %v467 = vpop.f32.mrf.mxu0
        %v468 = vadd.f32 %v260, %v467
        %469 = vmatmul.bf16.gmra.mxu0 %v337
        %v470 = vpop.f32.mrf.mxu0
        %v471 = vadd.f32 %v260, %v470
        %v472 = vpop.f32.mrf.mxu0
        %v473 = vadd.f32 %v260, %v472
        %474 = vmatmul.bf16.gmra.mxu0 %v338
        %v475 = vpop.f32.mrf.mxu0
        %v476 = vadd.f32 %v260, %v475
        %v477 = vpop.f32.mrf.mxu0
        %v478 = vadd.f32 %v260, %v477
        %479 = vmatmul.bf16.gmra.mxu0 %v339
        %v480 = vpop.f32.mrf.mxu0
        %v481 = vadd.f32 %v260, %v480
        %v482 = vpop.f32.mrf.mxu0
        %v483 = vadd.f32 %v260, %v482
        %484 = vmatmul.bf16.gmra.mxu0 %v340
        %v485 = vpop.f32.mrf.mxu0
        %v486 = vadd.f32 %v260, %v485
        %v487 = vpop.f32.mrf.mxu0
        %v488 = vadd.f32 %v260, %v487
        %489 = vmatmul.bf16.gmra.mxu0 %v341
        %v490 = vpop.f32.mrf.mxu0
        %v491 = vadd.f32 %v260, %v490
        %v492 = vpop.f32.mrf.mxu0
        %v493 = vadd.f32 %v260, %v492
        %494 = vdwg.mxu0
        %v495 = vxor.u32 %v416, 2147483648
        %v496 = vxor.u32 %v418, 2147483648
        %v497 = vxor.u32 %v421, 2147483648
        %v498 = vxor.u32 %v423, 2147483648
        %v499 = vxor.u32 %v426, 2147483648
        %v500 = vxor.u32 %v428, 2147483648
        %v501 = vxor.u32 %v431, 2147483648
        %v502 = vxor.u32 %v433, 2147483648
        %v503 = vxor.u32 %v436, 2147483648
        %v504 = vxor.u32 %v438, 2147483648
        %v505 = vxor.u32 %v441, 2147483648
        %v506 = vxor.u32 %v443, 2147483648
        %v507 = vxor.u32 %v446, 2147483648
        %v508 = vxor.u32 %v448, 2147483648
        %v509 = vxor.u32 %v451, 2147483648
        %v510 = vxor.u32 %v453, 2147483648
        %v511 = vxor.u32 %v456, 2147483648
        %v512 = vxor.u32 %v458, 2147483648
        %v513 = vxor.u32 %v461, 2147483648
        %v514 = vxor.u32 %v463, 2147483648
        %v515 = vxor.u32 %v466, 2147483648
        %v516 = vxor.u32 %v468, 2147483648
        %v517 = vxor.u32 %v471, 2147483648
        %v518 = vxor.u32 %v473, 2147483648
        %v519 = vxor.u32 %v476, 2147483648
        %v520 = vxor.u32 %v478, 2147483648
        %v521 = vxor.u32 %v481, 2147483648
        %v522 = vxor.u32 %v483, 2147483648
        %v523 = vxor.u32 %v486, 2147483648
        %v524 = vxor.u32 %v488, 2147483648
        %v525 = vxor.u32 %v491, 2147483648
        %v526 = vxor.u32 %v493, 2147483648
        %v527 = vmul.f32 %v495, 1.442695
        %v528 = vpow.pop %v527
        %v529 = vmul.f32 %v496, 1.442695
        %v530 = vpow.pop %v529
        %v531 = vmul.f32 %v497, 1.442695
        %v532 = vpow.pop %v531
        %v533 = vmul.f32 %v498, 1.442695
        %v534 = vpow.pop %v533
        %v535 = vmul.f32 %v499, 1.442695
        %v536 = vpow.pop %v535
        %v537 = vmul.f32 %v500, 1.442695
        %v538 = vpow.pop %v537
        %v539 = vmul.f32 %v501, 1.442695
        %v540 = vpow.pop %v539
        %v541 = vmul.f32 %v502, 1.442695
        %v542 = vpow.pop %v541
        %v543 = vmul.f32 %v503, 1.442695
        %v544 = vpow.pop %v543
        %v545 = vmul.f32 %v504, 1.442695
        %v546 = vpow.pop %v545
        %v547 = vmul.f32 %v505, 1.442695
        %v548 = vpow.pop %v547
        %v549 = vmul.f32 %v506, 1.442695
        %v550 = vpow.pop %v549
        %v551 = vmul.f32 %v507, 1.442695
        %v552 = vpow.pop %v551
        %v553 = vmul.f32 %v508, 1.442695
        %v554 = vpow.pop %v553
        %v555 = vmul.f32 %v509, 1.442695
        %v556 = vpow.pop %v555
        %v557 = vmul.f32 %v510, 1.442695
        %v558 = vpow.pop %v557
        %v559 = vmul.f32 %v511, 1.442695
        %v560 = vpow.pop %v559
        %v561 = vmul.f32 %v512, 1.442695
        %v562 = vpow.pop %v561
        %v563 = vmul.f32 %v513, 1.442695
        %v564 = vpow.pop %v563
        %v565 = vmul.f32 %v514, 1.442695
        %v566 = vpow.pop %v565
        %v567 = vmul.f32 %v515, 1.442695
        %v568 = vpow.pop %v567
        %v569 = vmul.f32 %v516, 1.442695
        %v570 = vpow.pop %v569
        %v571 = vmul.f32 %v517, 1.442695
        %v572 = vpow.pop %v571
        %v573 = vmul.f32 %v518, 1.442695
        %v574 = vpow.pop %v573
        %v575 = vmul.f32 %v519, 1.442695
        %v576 = vpow.pop %v575
        %v577 = vmul.f32 %v520, 1.442695
        %v578 = vpow.pop %v577
        %v579 = vmul.f32 %v521, 1.442695
        %v580 = vpow.pop %v579
        %v581 = vmul.f32 %v522, 1.442695
        %v582 = vpow.pop %v581
        %v583 = vmul.f32 %v523, 1.442695
        %v584 = vpow.pop %v583
        %v585 = vmul.f32 %v524, 1.442695
        %v586 = vpow.pop %v585
        %v587 = vmul.f32 %v525, 1.442695
        %v588 = vpow.pop %v587
        %v589 = vmul.f32 %v526, 1.442695
        %v590 = vpow.pop %v589
        %v591 = vadd.f32 %v528, 1.0
        %v592 = vadd.f32 %v530, 1.0
        %v593 = vadd.f32 %v532, 1.0
        %v594 = vadd.f32 %v534, 1.0
        %v595 = vadd.f32 %v536, 1.0
        %v596 = vadd.f32 %v538, 1.0
        %v597 = vadd.f32 %v540, 1.0
        %v598 = vadd.f32 %v542, 1.0
        %v599 = vadd.f32 %v544, 1.0
        %v600 = vadd.f32 %v546, 1.0
        %v601 = vadd.f32 %v548, 1.0
        %v602 = vadd.f32 %v550, 1.0
        %v603 = vadd.f32 %v552, 1.0
        %v604 = vadd.f32 %v554, 1.0
        %v605 = vadd.f32 %v556, 1.0
        %v606 = vadd.f32 %v558, 1.0
        %v607 = vadd.f32 %v560, 1.0
        %v608 = vadd.f32 %v562, 1.0
        %v609 = vadd.f32 %v564, 1.0
        %v610 = vadd.f32 %v566, 1.0
        %v611 = vadd.f32 %v568, 1.0
        %v612 = vadd.f32 %v570, 1.0
        %v613 = vadd.f32 %v572, 1.0
        %v614 = vadd.f32 %v574, 1.0
        %v615 = vadd.f32 %v576, 1.0
        %v616 = vadd.f32 %v578, 1.0
        %v617 = vadd.f32 %v580, 1.0
        %v618 = vadd.f32 %v582, 1.0
        %v619 = vadd.f32 %v584, 1.0
        %v620 = vadd.f32 %v586, 1.0
        %v621 = vadd.f32 %v588, 1.0
        %v622 = vadd.f32 %v590, 1.0
        %v623 = vrcp.pop %v591
        %v624 = vmul.f32 %v591, %v623
        %v625 = vsub.f32 1.0, %v624
        %v626 = vmul.f32 %v623, %v625
        %v627 = vadd.f32 %v623, %v626
        %vm628 = vweird.f32 %v591
        %vm629 = vweird.f32 %v623
        %vm630 = vmor %vm628, %vm629
        %v631 = vsel %vm630, %v623, %v627
        %v632 = vand.u32 2147483647, %v591
        %vm633 = vcmp.eq.f32.partialorder %v632, 8.507059e+37
        %v634 = vand.u32 %v591, 2147483648
        %v635 = vor.u32 1.1754944e-38, %v634
        %v636 = vsel %vm633, %v635, %v631
        %v637 = vmul.f32 1.0, %v636
        %v638 = vrcp.pop %v592
        %v639 = vmul.f32 %v592, %v638
        %v640 = vsub.f32 1.0, %v639
        %v641 = vmul.f32 %v638, %v640
        %v642 = vadd.f32 %v638, %v641
        %vm643 = vweird.f32 %v592
        %vm644 = vweird.f32 %v638
        %vm645 = vmor %vm643, %vm644
        %v646 = vsel %vm645, %v638, %v642
        %v647 = vand.u32 2147483647, %v592
        %vm648 = vcmp.eq.f32.partialorder %v647, 8.507059e+37
        %v649 = vand.u32 %v592, 2147483648
        %v650 = vor.u32 1.1754944e-38, %v649
        %v651 = vsel %vm648, %v650, %v646
        %v652 = vmul.f32 1.0, %v651
        %v653 = vrcp.pop %v593
        %v654 = vmul.f32 %v593, %v653
        %v655 = vsub.f32 1.0, %v654
        %v656 = vmul.f32 %v653, %v655
        %v657 = vadd.f32 %v653, %v656
        %vm658 = vweird.f32 %v593
        %vm659 = vweird.f32 %v653
        %vm660 = vmor %vm658, %vm659
        %v661 = vsel %vm660, %v653, %v657
        %v662 = vand.u32 2147483647, %v593
        %vm663 = vcmp.eq.f32.partialorder %v662, 8.507059e+37
        %v664 = vand.u32 %v593, 2147483648
        %v665 = vor.u32 1.1754944e-38, %v664
        %v666 = vsel %vm663, %v665, %v661
        %v667 = vmul.f32 1.0, %v666
        %v668 = vrcp.pop %v594
        %v669 = vmul.f32 %v594, %v668
        %v670 = vsub.f32 1.0, %v669
        %v671 = vmul.f32 %v668, %v670
        %v672 = vadd.f32 %v668, %v671
        %vm673 = vweird.f32 %v594
        %vm674 = vweird.f32 %v668
        %vm675 = vmor %vm673, %vm674
        %v676 = vsel %vm675, %v668, %v672
        %v677 = vand.u32 2147483647, %v594
        %vm678 = vcmp.eq.f32.partialorder %v677, 8.507059e+37
        %v679 = vand.u32 %v594, 2147483648
        %v680 = vor.u32 1.1754944e-38, %v679
        %v681 = vsel %vm678, %v680, %v676
        %v682 = vmul.f32 1.0, %v681
        %v683 = vrcp.pop %v595
        %v684 = vmul.f32 %v595, %v683
        %v685 = vsub.f32 1.0, %v684
        %v686 = vmul.f32 %v683, %v685
        %v687 = vadd.f32 %v683, %v686
        %vm688 = vweird.f32 %v595
        %vm689 = vweird.f32 %v683
        %vm690 = vmor %vm688, %vm689
        %v691 = vsel %vm690, %v683, %v687
        %v692 = vand.u32 2147483647, %v595
        %vm693 = vcmp.eq.f32.partialorder %v692, 8.507059e+37
        %v694 = vand.u32 %v595, 2147483648
        %v695 = vor.u32 1.1754944e-38, %v694
        %v696 = vsel %vm693, %v695, %v691
        %v697 = vmul.f32 1.0, %v696
        %v698 = vrcp.pop %v596
        %v699 = vmul.f32 %v596, %v698
        %v700 = vsub.f32 1.0, %v699
        %v701 = vmul.f32 %v698, %v700
        %v702 = vadd.f32 %v698, %v701
        %vm703 = vweird.f32 %v596
        %vm704 = vweird.f32 %v698
        %vm705 = vmor %vm703, %vm704
        %v706 = vsel %vm705, %v698, %v702
        %v707 = vand.u32 2147483647, %v596
        %vm708 = vcmp.eq.f32.partialorder %v707, 8.507059e+37
        %v709 = vand.u32 %v596, 2147483648
        %v710 = vor.u32 1.1754944e-38, %v709
        %v711 = vsel %vm708, %v710, %v706
        %v712 = vmul.f32 1.0, %v711
        %v713 = vrcp.pop %v597
        %v714 = vmul.f32 %v597, %v713
        %v715 = vsub.f32 1.0, %v714
        %v716 = vmul.f32 %v713, %v715
        %v717 = vadd.f32 %v713, %v716
        %vm718 = vweird.f32 %v597
        %vm719 = vweird.f32 %v713
        %vm720 = vmor %vm718, %vm719
        %v721 = vsel %vm720, %v713, %v717
        %v722 = vand.u32 2147483647, %v597
        %vm723 = vcmp.eq.f32.partialorder %v722, 8.507059e+37
        %v724 = vand.u32 %v597, 2147483648
        %v725 = vor.u32 1.1754944e-38, %v724
        %v726 = vsel %vm723, %v725, %v721
        %v727 = vmul.f32 1.0, %v726
        %v728 = vrcp.pop %v598
        %v729 = vmul.f32 %v598, %v728
        %v730 = vsub.f32 1.0, %v729
        %v731 = vmul.f32 %v728, %v730
        %v732 = vadd.f32 %v728, %v731
        %vm733 = vweird.f32 %v598
        %vm734 = vweird.f32 %v728
        %vm735 = vmor %vm733, %vm734
        %v736 = vsel %vm735, %v728, %v732
        %v737 = vand.u32 2147483647, %v598
        %vm738 = vcmp.eq.f32.partialorder %v737, 8.507059e+37
        %v739 = vand.u32 %v598, 2147483648
        %v740 = vor.u32 1.1754944e-38, %v739
        %v741 = vsel %vm738, %v740, %v736
        %v742 = vmul.f32 1.0, %v741
        %v743 = vrcp.pop %v599
        %v744 = vmul.f32 %v599, %v743
        %v745 = vsub.f32 1.0, %v744
        %v746 = vmul.f32 %v743, %v745
        %v747 = vadd.f32 %v743, %v746
        %vm748 = vweird.f32 %v599
        %vm749 = vweird.f32 %v743
        %vm750 = vmor %vm748, %vm749
        %v751 = vsel %vm750, %v743, %v747
        %v752 = vand.u32 2147483647, %v599
        %vm753 = vcmp.eq.f32.partialorder %v752, 8.507059e+37
        %v754 = vand.u32 %v599, 2147483648
        %v755 = vor.u32 1.1754944e-38, %v754
        %v756 = vsel %vm753, %v755, %v751
        %v757 = vmul.f32 1.0, %v756
        %v758 = vrcp.pop %v600
        %v759 = vmul.f32 %v600, %v758
        %v760 = vsub.f32 1.0, %v759
        %v761 = vmul.f32 %v758, %v760
        %v762 = vadd.f32 %v758, %v761
        %vm763 = vweird.f32 %v600
        %vm764 = vweird.f32 %v758
        %vm765 = vmor %vm763, %vm764
        %v766 = vsel %vm765, %v758, %v762
        %v767 = vand.u32 2147483647, %v600
        %vm768 = vcmp.eq.f32.partialorder %v767, 8.507059e+37
        %v769 = vand.u32 %v600, 2147483648
        %v770 = vor.u32 1.1754944e-38, %v769
        %v771 = vsel %vm768, %v770, %v766
        %v772 = vmul.f32 1.0, %v771
        %v773 = vrcp.pop %v601
        %v774 = vmul.f32 %v601, %v773
        %v775 = vsub.f32 1.0, %v774
        %v776 = vmul.f32 %v773, %v775
        %v777 = vadd.f32 %v773, %v776
        %vm778 = vweird.f32 %v601
        %vm779 = vweird.f32 %v773
        %vm780 = vmor %vm778, %vm779
        %v781 = vsel %vm780, %v773, %v777
        %v782 = vand.u32 2147483647, %v601
        %vm783 = vcmp.eq.f32.partialorder %v782, 8.507059e+37
        %v784 = vand.u32 %v601, 2147483648
        %v785 = vor.u32 1.1754944e-38, %v784
        %v786 = vsel %vm783, %v785, %v781
        %v787 = vmul.f32 1.0, %v786
        %v788 = vrcp.pop %v602
        %v789 = vmul.f32 %v602, %v788
        %v790 = vsub.f32 1.0, %v789
        %v791 = vmul.f32 %v788, %v790
        %v792 = vadd.f32 %v788, %v791
        %vm793 = vweird.f32 %v602
        %vm794 = vweird.f32 %v788
        %vm795 = vmor %vm793, %vm794
        %v796 = vsel %vm795, %v788, %v792
        %v797 = vand.u32 2147483647, %v602
        %vm798 = vcmp.eq.f32.partialorder %v797, 8.507059e+37
        %v799 = vand.u32 %v602, 2147483648
        %v800 = vor.u32 1.1754944e-38, %v799
        %v801 = vsel %vm798, %v800, %v796
        %v802 = vmul.f32 1.0, %v801
        %v803 = vrcp.pop %v603
        %v804 = vmul.f32 %v603, %v803
        %v805 = vsub.f32 1.0, %v804
        %v806 = vmul.f32 %v803, %v805
        %v807 = vadd.f32 %v803, %v806
        %vm808 = vweird.f32 %v603
        %vm809 = vweird.f32 %v803
        %vm810 = vmor %vm808, %vm809
        %v811 = vsel %vm810, %v803, %v807
        %v812 = vand.u32 2147483647, %v603
        %vm813 = vcmp.eq.f32.partialorder %v812, 8.507059e+37
        %v814 = vand.u32 %v603, 2147483648
        %v815 = vor.u32 1.1754944e-38, %v814
        %v816 = vsel %vm813, %v815, %v811
        %v817 = vmul.f32 1.0, %v816
        %v818 = vrcp.pop %v604
        %v819 = vmul.f32 %v604, %v818
        %v820 = vsub.f32 1.0, %v819
        %v821 = vmul.f32 %v818, %v820
        %v822 = vadd.f32 %v818, %v821
        %vm823 = vweird.f32 %v604
        %vm824 = vweird.f32 %v818
        %vm825 = vmor %vm823, %vm824
        %v826 = vsel %vm825, %v818, %v822
        %v827 = vand.u32 2147483647, %v604
        %vm828 = vcmp.eq.f32.partialorder %v827, 8.507059e+37
        %v829 = vand.u32 %v604, 2147483648
        %v830 = vor.u32 1.1754944e-38, %v829
        %v831 = vsel %vm828, %v830, %v826
        %v832 = vmul.f32 1.0, %v831
        %v833 = vrcp.pop %v605
        %v834 = vmul.f32 %v605, %v833
        %v835 = vsub.f32 1.0, %v834
        %v836 = vmul.f32 %v833, %v835
        %v837 = vadd.f32 %v833, %v836
        %vm838 = vweird.f32 %v605
        %vm839 = vweird.f32 %v833
        %vm840 = vmor %vm838, %vm839
        %v841 = vsel %vm840, %v833, %v837
        %v842 = vand.u32 2147483647, %v605
        %vm843 = vcmp.eq.f32.partialorder %v842, 8.507059e+37
        %v844 = vand.u32 %v605, 2147483648
        %v845 = vor.u32 1.1754944e-38, %v844
        %v846 = vsel %vm843, %v845, %v841
        %v847 = vmul.f32 1.0, %v846
        %v848 = vrcp.pop %v606
        %v849 = vmul.f32 %v606, %v848
        %v850 = vsub.f32 1.0, %v849
        %v851 = vmul.f32 %v848, %v850
        %v852 = vadd.f32 %v848, %v851
        %vm853 = vweird.f32 %v606
        %vm854 = vweird.f32 %v848
        %vm855 = vmor %vm853, %vm854
        %v856 = vsel %vm855, %v848, %v852
        %v857 = vand.u32 2147483647, %v606
        %vm858 = vcmp.eq.f32.partialorder %v857, 8.507059e+37
        %v859 = vand.u32 %v606, 2147483648
        %v860 = vor.u32 1.1754944e-38, %v859
        %v861 = vsel %vm858, %v860, %v856
        %v862 = vmul.f32 1.0, %v861
        %v863 = vrcp.pop %v607
        %v864 = vmul.f32 %v607, %v863
        %v865 = vsub.f32 1.0, %v864
        %v866 = vmul.f32 %v863, %v865
        %v867 = vadd.f32 %v863, %v866
        %vm868 = vweird.f32 %v607
        %vm869 = vweird.f32 %v863
        %vm870 = vmor %vm868, %vm869
        %v871 = vsel %vm870, %v863, %v867
        %v872 = vand.u32 2147483647, %v607
        %vm873 = vcmp.eq.f32.partialorder %v872, 8.507059e+37
        %v874 = vand.u32 %v607, 2147483648
        %v875 = vor.u32 1.1754944e-38, %v874
        %v876 = vsel %vm873, %v875, %v871
        %v877 = vmul.f32 1.0, %v876
        %v878 = vrcp.pop %v608
        %v879 = vmul.f32 %v608, %v878
        %v880 = vsub.f32 1.0, %v879
        %v881 = vmul.f32 %v878, %v880
        %v882 = vadd.f32 %v878, %v881
        %vm883 = vweird.f32 %v608
        %vm884 = vweird.f32 %v878
        %vm885 = vmor %vm883, %vm884
        %v886 = vsel %vm885, %v878, %v882
        %v887 = vand.u32 2147483647, %v608
        %vm888 = vcmp.eq.f32.partialorder %v887, 8.507059e+37
        %v889 = vand.u32 %v608, 2147483648
        %v890 = vor.u32 1.1754944e-38, %v889
        %v891 = vsel %vm888, %v890, %v886
        %v892 = vmul.f32 1.0, %v891
        %v893 = vrcp.pop %v609
        %v894 = vmul.f32 %v609, %v893
        %v895 = vsub.f32 1.0, %v894
        %v896 = vmul.f32 %v893, %v895
        %v897 = vadd.f32 %v893, %v896
        %vm898 = vweird.f32 %v609
        %vm899 = vweird.f32 %v893
        %vm900 = vmor %vm898, %vm899
        %v901 = vsel %vm900, %v893, %v897
        %v902 = vand.u32 2147483647, %v609
        %vm903 = vcmp.eq.f32.partialorder %v902, 8.507059e+37
        %v904 = vand.u32 %v609, 2147483648
        %v905 = vor.u32 1.1754944e-38, %v904
        %v906 = vsel %vm903, %v905, %v901
        %v907 = vmul.f32 1.0, %v906
        %v908 = vrcp.pop %v610
        %v909 = vmul.f32 %v610, %v908
        %v910 = vsub.f32 1.0, %v909
        %v911 = vmul.f32 %v908, %v910
        %v912 = vadd.f32 %v908, %v911
        %vm913 = vweird.f32 %v610
        %vm914 = vweird.f32 %v908
        %vm915 = vmor %vm913, %vm914
        %v916 = vsel %vm915, %v908, %v912
        %v917 = vand.u32 2147483647, %v610
        %vm918 = vcmp.eq.f32.partialorder %v917, 8.507059e+37
        %v919 = vand.u32 %v610, 2147483648
        %v920 = vor.u32 1.1754944e-38, %v919
        %v921 = vsel %vm918, %v920, %v916
        %v922 = vmul.f32 1.0, %v921
        %v923 = vrcp.pop %v611
        %v924 = vmul.f32 %v611, %v923
        %v925 = vsub.f32 1.0, %v924
        %v926 = vmul.f32 %v923, %v925
        %v927 = vadd.f32 %v923, %v926
        %vm928 = vweird.f32 %v611
        %vm929 = vweird.f32 %v923
        %vm930 = vmor %vm928, %vm929
        %v931 = vsel %vm930, %v923, %v927
        %v932 = vand.u32 2147483647, %v611
        %vm933 = vcmp.eq.f32.partialorder %v932, 8.507059e+37
        %v934 = vand.u32 %v611, 2147483648
        %v935 = vor.u32 1.1754944e-38, %v934
        %v936 = vsel %vm933, %v935, %v931
        %v937 = vmul.f32 1.0, %v936
        %v938 = vrcp.pop %v612
        %v939 = vmul.f32 %v612, %v938
        %v940 = vsub.f32 1.0, %v939
        %v941 = vmul.f32 %v938, %v940
        %v942 = vadd.f32 %v938, %v941
        %vm943 = vweird.f32 %v612
        %vm944 = vweird.f32 %v938
        %vm945 = vmor %vm943, %vm944
        %v946 = vsel %vm945, %v938, %v942
        %v947 = vand.u32 2147483647, %v612
        %vm948 = vcmp.eq.f32.partialorder %v947, 8.507059e+37
        %v949 = vand.u32 %v612, 2147483648
        %v950 = vor.u32 1.1754944e-38, %v949
        %v951 = vsel %vm948, %v950, %v946
        %v952 = vmul.f32 1.0, %v951
        %v953 = vrcp.pop %v613
        %v954 = vmul.f32 %v613, %v953
        %v955 = vsub.f32 1.0, %v954
        %v956 = vmul.f32 %v953, %v955
        %v957 = vadd.f32 %v953, %v956
        %vm958 = vweird.f32 %v613
        %vm959 = vweird.f32 %v953
        %vm960 = vmor %vm958, %vm959
        %v961 = vsel %vm960, %v953, %v957
        %v962 = vand.u32 2147483647, %v613
        %vm963 = vcmp.eq.f32.partialorder %v962, 8.507059e+37
        %v964 = vand.u32 %v613, 2147483648
        %v965 = vor.u32 1.1754944e-38, %v964
        %v966 = vsel %vm963, %v965, %v961
        %v967 = vmul.f32 1.0, %v966
        %v968 = vrcp.pop %v614
        %v969 = vmul.f32 %v614, %v968
        %v970 = vsub.f32 1.0, %v969
        %v971 = vmul.f32 %v968, %v970
        %v972 = vadd.f32 %v968, %v971
        %vm973 = vweird.f32 %v614
        %vm974 = vweird.f32 %v968
        %vm975 = vmor %vm973, %vm974
        %v976 = vsel %vm975, %v968, %v972
        %v977 = vand.u32 2147483647, %v614
        %vm978 = vcmp.eq.f32.partialorder %v977, 8.507059e+37
        %v979 = vand.u32 %v614, 2147483648
        %v980 = vor.u32 1.1754944e-38, %v979
        %v981 = vsel %vm978, %v980, %v976
        %v982 = vmul.f32 1.0, %v981
        %v983 = vrcp.pop %v615
        %v984 = vmul.f32 %v615, %v983
        %v985 = vsub.f32 1.0, %v984
        %v986 = vmul.f32 %v983, %v985
        %v987 = vadd.f32 %v983, %v986
        %vm988 = vweird.f32 %v615
        %vm989 = vweird.f32 %v983
        %vm990 = vmor %vm988, %vm989
        %v991 = vsel %vm990, %v983, %v987
        %v992 = vand.u32 2147483647, %v615
        %vm993 = vcmp.eq.f32.partialorder %v992, 8.507059e+37
        %v994 = vand.u32 %v615, 2147483648
        %v995 = vor.u32 1.1754944e-38, %v994
        %v996 = vsel %vm993, %v995, %v991
        %v997 = vmul.f32 1.0, %v996
        %v998 = vrcp.pop %v616
        %v999 = vmul.f32 %v616, %v998
        %v1000 = vsub.f32 1.0, %v999
        %v1001 = vmul.f32 %v998, %v1000
        %v1002 = vadd.f32 %v998, %v1001
        %vm1003 = vweird.f32 %v616
        %vm1004 = vweird.f32 %v998
        %vm1005 = vmor %vm1003, %vm1004
        %v1006 = vsel %vm1005, %v998, %v1002
        %v1007 = vand.u32 2147483647, %v616
        %vm1008 = vcmp.eq.f32.partialorder %v1007, 8.507059e+37
        %v1009 = vand.u32 %v616, 2147483648
        %v1010 = vor.u32 1.1754944e-38, %v1009
        %v1011 = vsel %vm1008, %v1010, %v1006
        %v1012 = vmul.f32 1.0, %v1011
        %v1013 = vrcp.pop %v617
        %v1014 = vmul.f32 %v617, %v1013
        %v1015 = vsub.f32 1.0, %v1014
        %v1016 = vmul.f32 %v1013, %v1015
        %v1017 = vadd.f32 %v1013, %v1016
        %vm1018 = vweird.f32 %v617
        %vm1019 = vweird.f32 %v1013
        %vm1020 = vmor %vm1018, %vm1019
        %v1021 = vsel %vm1020, %v1013, %v1017
        %v1022 = vand.u32 2147483647, %v617
        %vm1023 = vcmp.eq.f32.partialorder %v1022, 8.507059e+37
        %v1024 = vand.u32 %v617, 2147483648
        %v1025 = vor.u32 1.1754944e-38, %v1024
        %v1026 = vsel %vm1023, %v1025, %v1021
        %v1027 = vmul.f32 1.0, %v1026
        %v1028 = vrcp.pop %v618
        %v1029 = vmul.f32 %v618, %v1028
        %v1030 = vsub.f32 1.0, %v1029
        %v1031 = vmul.f32 %v1028, %v1030
        %v1032 = vadd.f32 %v1028, %v1031
        %vm1033 = vweird.f32 %v618
        %vm1034 = vweird.f32 %v1028
        %vm1035 = vmor %vm1033, %vm1034
        %v1036 = vsel %vm1035, %v1028, %v1032
        %v1037 = vand.u32 2147483647, %v618
        %vm1038 = vcmp.eq.f32.partialorder %v1037, 8.507059e+37
        %v1039 = vand.u32 %v618, 2147483648
        %v1040 = vor.u32 1.1754944e-38, %v1039
        %v1041 = vsel %vm1038, %v1040, %v1036
        %v1042 = vmul.f32 1.0, %v1041
        %v1043 = vrcp.pop %v619
        %v1044 = vmul.f32 %v619, %v1043
        %v1045 = vsub.f32 1.0, %v1044
        %v1046 = vmul.f32 %v1043, %v1045
        %v1047 = vadd.f32 %v1043, %v1046
        %vm1048 = vweird.f32 %v619
        %vm1049 = vweird.f32 %v1043
        %vm1050 = vmor %vm1048, %vm1049
        %v1051 = vsel %vm1050, %v1043, %v1047
        %v1052 = vand.u32 2147483647, %v619
        %vm1053 = vcmp.eq.f32.partialorder %v1052, 8.507059e+37
        %v1054 = vand.u32 %v619, 2147483648
        %v1055 = vor.u32 1.1754944e-38, %v1054
        %v1056 = vsel %vm1053, %v1055, %v1051
        %v1057 = vmul.f32 1.0, %v1056
        %v1058 = vrcp.pop %v620
        %v1059 = vmul.f32 %v620, %v1058
        %v1060 = vsub.f32 1.0, %v1059
        %v1061 = vmul.f32 %v1058, %v1060
        %v1062 = vadd.f32 %v1058, %v1061
        %vm1063 = vweird.f32 %v620
        %vm1064 = vweird.f32 %v1058
        %vm1065 = vmor %vm1063, %vm1064
        %v1066 = vsel %vm1065, %v1058, %v1062
        %v1067 = vand.u32 2147483647, %v620
        %vm1068 = vcmp.eq.f32.partialorder %v1067, 8.507059e+37
        %v1069 = vand.u32 %v620, 2147483648
        %v1070 = vor.u32 1.1754944e-38, %v1069
        %v1071 = vsel %vm1068, %v1070, %v1066
        %v1072 = vmul.f32 1.0, %v1071
        %v1073 = vrcp.pop %v621
        %v1074 = vmul.f32 %v621, %v1073
        %v1075 = vsub.f32 1.0, %v1074
        %v1076 = vmul.f32 %v1073, %v1075
        %v1077 = vadd.f32 %v1073, %v1076
        %vm1078 = vweird.f32 %v621
        %vm1079 = vweird.f32 %v1073
        %vm1080 = vmor %vm1078, %vm1079
        %v1081 = vsel %vm1080, %v1073, %v1077
        %v1082 = vand.u32 2147483647, %v621
        %vm1083 = vcmp.eq.f32.partialorder %v1082, 8.507059e+37
        %v1084 = vand.u32 %v621, 2147483648
        %v1085 = vor.u32 1.1754944e-38, %v1084
        %v1086 = vsel %vm1083, %v1085, %v1081
        %v1087 = vmul.f32 1.0, %v1086
        %v1088 = vrcp.pop %v622
        %v1089 = vmul.f32 %v622, %v1088
        %v1090 = vsub.f32 1.0, %v1089
        %v1091 = vmul.f32 %v1088, %v1090
        %v1092 = vadd.f32 %v1088, %v1091
        %vm1093 = vweird.f32 %v622
        %vm1094 = vweird.f32 %v1088
        %vm1095 = vmor %vm1093, %vm1094
        %v1096 = vsel %vm1095, %v1088, %v1092
        %v1097 = vand.u32 2147483647, %v622
        %vm1098 = vcmp.eq.f32.partialorder %v1097, 8.507059e+37
        %v1099 = vand.u32 %v622, 2147483648
        %v1100 = vor.u32 1.1754944e-38, %v1099
        %v1101 = vsel %vm1098, %v1100, %v1096
        %v1102 = vmul.f32 1.0, %v1101
        %v1103 = vmul.f32 %v416, %v637
        %v1104 = vmul.f32 %v418, %v652
        %v1105 = vmul.f32 %v421, %v667
        %v1106 = vmul.f32 %v423, %v682
        %v1107 = vmul.f32 %v426, %v697
        %v1108 = vmul.f32 %v428, %v712
        %v1109 = vmul.f32 %v431, %v727
        %v1110 = vmul.f32 %v433, %v742
        %v1111 = vmul.f32 %v436, %v757
        %v1112 = vmul.f32 %v438, %v772
        %v1113 = vmul.f32 %v441, %v787
        %v1114 = vmul.f32 %v443, %v802
        %v1115 = vmul.f32 %v446, %v817
        %v1116 = vmul.f32 %v448, %v832
        %v1117 = vmul.f32 %v451, %v847
        %v1118 = vmul.f32 %v453, %v862
        %v1119 = vmul.f32 %v456, %v877
        %v1120 = vmul.f32 %v458, %v892
        %v1121 = vmul.f32 %v461, %v907
        %v1122 = vmul.f32 %v463, %v922
        %v1123 = vmul.f32 %v466, %v937
        %v1124 = vmul.f32 %v468, %v952
        %v1125 = vmul.f32 %v471, %v967
        %v1126 = vmul.f32 %v473, %v982
        %v1127 = vmul.f32 %v476, %v997
        %v1128 = vmul.f32 %v478, %v1012
        %v1129 = vmul.f32 %v481, %v1027
        %v1130 = vmul.f32 %v483, %v1042
        %v1131 = vmul.f32 %v486, %v1057
        %v1132 = vmul.f32 %v488, %v1072
        %v1133 = vmul.f32 %v491, %v1087
        %v1134 = vmul.f32 %v493, %v1102
        %1135 = vst [vmem:[%s207] sm:$0xff] %v1103
        %1136 = vst [vmem:[%s207 + $0x8] sm:$0xff] %v1104
        %1137 = vst [vmem:[%s207 + $0x10] sm:$0xff] %v1105
        %1138 = vst [vmem:[%s207 + $0x18] sm:$0xff] %v1106
        %1139 = vst [vmem:[%s207 + $0x20] sm:$0xff] %v1107
        %1140 = vst [vmem:[%s207 + $0x28] sm:$0xff] %v1108
        %1141 = vst [vmem:[%s207 + $0x30] sm:$0xff] %v1109
        %1142 = vst [vmem:[%s207 + $0x38] sm:$0xff] %v1110
        %1143 = vst [vmem:[%s207 + $0x40] sm:$0xff] %v1111
        %1144 = vst [vmem:[%s207 + $0x48] sm:$0xff] %v1112
        %1145 = vst [vmem:[%s207 + $0x50] sm:$0xff] %v1113
        %1146 = vst [vmem:[%s207 + $0x58] sm:$0xff] %v1114
        %1147 = vst [vmem:[%s207 + $0x60] sm:$0xff] %v1115
        %1148 = vst [vmem:[%s207 + $0x68] sm:$0xff] %v1116
        %1149 = vst [vmem:[%s207 + $0x70] sm:$0xff] %v1117
        %1150 = vst [vmem:[%s207 + $0x78] sm:$0xff] %v1118
        %1151 = vst [vmem:[%s207 + $0x80] sm:$0xff] %v1119
        %1152 = vst [vmem:[%s207 + $0x88] sm:$0xff] %v1120
        %1153 = vst [vmem:[%s207 + $0x90] sm:$0xff] %v1121
        %1154 = vst [vmem:[%s207 + $0x98] sm:$0xff] %v1122
        %1155 = vst [vmem:[%s207 + $0xa0] sm:$0xff] %v1123
        %1156 = vst [vmem:[%s207 + $0xa8] sm:$0xff] %v1124
        %1157 = vst [vmem:[%s207 + $0xb0] sm:$0xff] %v1125
        %1158 = vst [vmem:[%s207 + $0xb8] sm:$0xff] %v1126
        %1159 = vst [vmem:[%s207 + $0xc0] sm:$0xff] %v1127
        %1160 = vst [vmem:[%s207 + $0xc8] sm:$0xff] %v1128
        %1161 = vst [vmem:[%s207 + $0xd0] sm:$0xff] %v1129
        %1162 = vst [vmem:[%s207 + $0xd8] sm:$0xff] %v1130
        %1163 = vst [vmem:[%s207 + $0xe0] sm:$0xff] %v1131
        %1164 = vst [vmem:[%s207 + $0xe8] sm:$0xff] %v1132
        %1165 = vst [vmem:[%s207 + $0xf0] sm:$0xff] %v1133
        %1166 = vst [vmem:[%s207 + $0xf8] sm:$0xff] %v1134
        %s1167 = sand.u32 %s97, 1
        %s1168 = scalar_lea.sflag [#allocation4], %s1167
        %s1169 = sand.u32 %s97, 1
        %s1170 = smul.addr %s1169, 256
        %s1171 = scalar_lea.vmem [#allocation7], %s1170
        // Predicated region
        $region41: #{tpu_custom_call.1} parent=31 // pred_check
          %p1172 = pneg %p107
        $region42: #{tpu_custom_call.1} parent=31 // pred_check_branch
          %1174 = sbr.rel (%p1172) target = $region44
        $region43: #{tpu_custom_call.1} parent=31 // pred_region
          %s1175 = smul.u32 32, %s21
          %1177 = vsyncadd %s1168, 0
          %s1178 = smul.addr %s1175, 8
          %s1179 = scalar_lea.hbm %s3, %s1178
          %s1180 = sshll.u32 %s1171, 4
          %s1181 = int_to_ptr.vmem [resolvable:$true] %s1180
          %s1182 = sshll.u32 %s1179, 4
          %s1183 = int_to_ptr.hbm [resolvable:$true] %s1182
          %1188 = dma.vmem_to_hbm [thread:$0]  %s1181, 4096, %s1183, %s1168, 128, 128, 8
        $region44: #{tpu_custom_call.1} parent=31 // pred_fallthru
          _
      $region32: #{tpu_custom_call.1} parent=5 // pred_fallthru
        _
      %p1189 = scmp.le.s32.totalorder 2, %s16
      // Predicated region
      $region45: #{tpu_custom_call.1} parent=5 // pred_check
        %p1190 = pneg %p1189
      $region46: #{tpu_custom_call.1} parent=5 // pred_check_branch
        %1192 = sbr.rel (%p1190) target = $region48
      $region47: #{tpu_custom_call.1} parent=5 // pred_region
        %s1193 = ssub.s32 %s16, 2
        // Predicated region
        $region49: #{tpu_custom_call.1} parent=47 // pred_check
          %p1194 = pneg %p113
        $region50: #{tpu_custom_call.1} parent=47 // pred_check_branch
          %1196 = sbr.rel (%p1194) target = $region52
        $region51: #{tpu_custom_call.1} parent=47 // pred_region
          %s1197 = sand.u32 %s98, 1
          %s1198 = scalar_lea.sflag [#allocation4], %s1197
          %s1199 = sand.u32 %s98, 1
          %s1200 = smul.addr %s1199, 256
          %s1201 = scalar_lea.vmem [#allocation7], %s1200
          %1203 = dma.done %s1198, 4096
        $region52: #{tpu_custom_call.1} parent=47 // pred_fallthru
          _
      $region48: #{tpu_custom_call.1} parent=5 // pred_fallthru
        _
    $region6: #{tpu_custom_call.1} parent=1 // loop_footer
      %s20 = sadd.s32 1, %s16
    $region7: #{tpu_custom_call.1} parent=1 // loop_footer_branch
      %15 = sbr.rel target = $region3
    $region8: #{tpu_custom_call.1} parent=1 // loop_exit
      _
    %1204 = vsyncpa [#allocation3], 1
    %s1205 = scalar_lea.sflag [#allocation3], 1
    %1206 = vsyncpa %s1205, 1
    %1207 = vsyncpa [#allocation6], 1
    %1208 = vsyncpa [#allocation4], 1
    %s1209 = scalar_lea.sflag [#allocation4], 1
    %1210 = vsyncpa %s1209, 1

</llo_original>
